<compile_context>
chip_gen: v7x
topology: tpu7x:2x2x1
jax: 0.10.0
libtpu: 0.0.40
codegen_flags: <defaults>
</compile_context>

<pallas_src>
import functools

import jax
import jax.numpy as jnp
from jax.experimental import pallas as pl
from jax.experimental.pallas import tpu as pltpu

_LANES = 128
_TARGET_BLOCK_ROWS = 2048  # (2048, 128) f32 tile = 1 MiB per pipeline buffer.


def _mse_sum_kernel(o_ref, r_ref, out_ref, acc_ref, *, inv_n):
    i = pl.program_id(0)

    @pl.when(i == 0)
    def _():
        acc_ref[...] = jnp.zeros_like(acc_ref)

    # Cast to f32 before subtracting (correct accumulation for bf16/fp8 inputs).
    d = r_ref[...].astype(jnp.float32) - o_ref[...].astype(jnp.float32)
    # Reduce only along the sublane (row) axis -> (1, 128) lane partial sums.
    acc_ref[...] += jnp.sum(d * d, axis=0, keepdims=True)

    @pl.when(i == pl.num_programs(0) - 1)
    def _():
        # Single finalize: cross-lane reduce + divide by the GLOBAL element
        # count (static constant), written once to the scalar SMEM output.
        out_ref[0, 0] = jnp.sum(acc_ref[...]) * jnp.float32(inv_n)


def mse_reconstruction_loss(original: jax.Array,
                            reconstructed: jax.Array,
                            *,
                            target_block_rows: int = _TARGET_BLOCK_ROWS) -> jax.Array:
    """Pallas equivalent of MSEReconstructionLoss.forward((original, reconstructed))."""
    assert original.shape == reconstructed.shape
    assert original.ndim >= 1

    # Last-feature select in the wrapper: avoids DMA-ing the full D axis.
    last = original.shape[-1] - 1
    o_last = jax.lax.index_in_dim(original, last, axis=original.ndim - 1,
                                  keepdims=False)
    r_last = jax.lax.index_in_dim(reconstructed, last, axis=reconstructed.ndim - 1,
                                  keepdims=False)

    n = int(o_last.size)
    o_flat = o_last.reshape(-1)
    r_flat = r_last.reshape(-1)

    # Lane-dense [rows, 128] layout, zero-padded to a whole number of tiles.
    rows_needed = max(1, pl.cdiv(n, _LANES))
    if rows_needed <= target_block_rows:
        block_rows = ((rows_needed + 7) // 8) * 8      # sublane multiple of 8
    else:
        block_rows = target_block_rows
    rows = pl.cdiv(rows_needed, block_rows) * block_rows
    num_blocks = rows // block_rows
    pad = rows * _LANES - n
    if pad:
        # Zero padding contributes exactly 0 to the squared-diff sum.
        o_flat = jnp.pad(o_flat, (0, pad))
        r_flat = jnp.pad(r_flat, (0, pad))

    o2 = o_flat.reshape(rows, _LANES)
    r2 = r_flat.reshape(rows, _LANES)

    kernel = functools.partial(_mse_sum_kernel, inv_n=1.0 / float(n))

    out = pl.pallas_call(
        kernel,
        out_shape=jax.ShapeDtypeStruct((1, 1), jnp.float32),
        grid=(num_blocks,),
        in_specs=[
            pl.BlockSpec((block_rows, _LANES), lambda i: (i, 0)),
            pl.BlockSpec((block_rows, _LANES), lambda i: (i, 0)),
        ],
        out_specs=pl.BlockSpec(memory_space=pltpu.SMEM),
        scratch_shapes=[pltpu.VMEM((1, _LANES), jnp.float32)],
        compiler_params=pltpu.CompilerParams(
            dimension_semantics=("arbitrary",)),
    )(o2, r2)
    return out[0, 0]


def _reference(original, reconstructed):
    o = original[..., -1].astype(jnp.float32)
    r = reconstructed[..., -1].astype(jnp.float32)
    return jnp.mean((r - o) ** 2)


if __name__ == "__main__":
    key = jax.random.PRNGKey(0)
    k1, k2, k3, k4 = jax.random.split(key, 4)

    # Test 1: small [B, S, D], single-block path.
    B, S, D = 2, 8, 32
    original = jax.random.normal(k1, (B, S, D), dtype=jnp.float32)
    reconstructed = jax.random.normal(k2, (B, S, D), dtype=jnp.float32)
    loss = mse_reconstruction_loss(original, reconstructed)
    jax.block_until_ready(loss)
    ref = _reference(original, reconstructed)
    assert jnp.allclose(loss, ref, rtol=1e-6, atol=1e-6), (loss, ref)

    # Test 2: exercise the multi-block accumulator path (small tile override).
    B2, S2, D2 = 4, 512, 16
    o2 = jax.random.normal(k3, (B2, S2, D2), dtype=jnp.float32)
    r2 = jax.random.normal(k4, (B2, S2, D2), dtype=jnp.float32)
    loss2 = mse_reconstruction_loss(o2, r2, target_block_rows=8)
    jax.block_until_ready(loss2)
    ref2 = _reference(o2, r2)
    assert jnp.allclose(loss2, ref2, rtol=1e-5, atol=1e-6), (loss2, ref2)

    print("KERNEL_OK")
</pallas_src>

<mosaic_0001>
module attributes {stable_mosaic.version = 11 : i64} {
  func.func @_mse_sum_kernel(%arg0: i32, %arg1: memref<8x128xf32, #tpu.memory_space<vmem>>, %arg2: memref<8x128xf32, #tpu.memory_space<vmem>>, %arg3: memref<1x1xf32, #tpu.memory_space<smem>>, %arg4: memref<1x128xf32, #tpu.memory_space<vmem>>) attributes {dimension_semantics = [#tpu.dimension_semantics<arbitrary>], iteration_bounds = array<i64: 1>, scalar_prefetch = 0 : i64, scratch_operands = 1 : i64, tpu.core_type = #tpu.core_type<tc>, window_params = [{transform_indices = @transform_0, window_bounds = array<i64: 8, 128>}, {transform_indices = @transform_1, window_bounds = array<i64: 8, 128>}, {transform_indices = @transform_2, window_bounds = array<i64: 1, 1>}]} {
    %c0_i32 = arith.constant 0 : i32
    %0 = arith.cmpi eq, %arg0, %c0_i32 : i32
    %1 = arith.extui %0 : i1 to i32
    %c0_i32_0 = arith.constant 0 : i32
    %2 = arith.cmpi ne, %1, %c0_i32_0 : i32
    scf.if %2 {
      %cst_10 = arith.constant 0.000000e+00 : f32
      %15 = vector.broadcast %cst_10 : f32 to vector<1x128xf32>
      %c0_11 = arith.constant 0 : index
      %c0_12 = arith.constant 0 : index
      %16 = vector.load %arg4[%c0_11, %c0_12] : memref<1x128xf32, #tpu.memory_space<vmem>>, vector<1x128xf32>
      tpu.vector_store %arg4[%c0_11, %c0_12], %15 {strides = array<i32>} : memref<1x128xf32, #tpu.memory_space<vmem>>, vector<1x128xf32>,
    } else {
    }
    %c0 = arith.constant 0 : index
    %c0_1 = arith.constant 0 : index
    %3 = vector.load %arg2[%c0, %c0_1] : memref<8x128xf32, #tpu.memory_space<vmem>>, vector<8x128xf32>
    %c0_2 = arith.constant 0 : index
    %c0_3 = arith.constant 0 : index
    %4 = vector.load %arg1[%c0_2, %c0_3] : memref<8x128xf32, #tpu.memory_space<vmem>>, vector<8x128xf32>
    %5 = arith.subf %3, %4 : vector<8x128xf32>
    %c0_4 = arith.constant 0 : index
    %c0_5 = arith.constant 0 : index
    %6 = vector.load %arg4[%c0_4, %c0_5] : memref<1x128xf32, #tpu.memory_space<vmem>>, vector<1x128xf32>
    %7 = arith.mulf %5, %5 : vector<8x128xf32>
    %cst = arith.constant dense<0.000000e+00> : vector<128xf32>
    %8 = vector.multi_reduction <add>, %7, %cst [0] : vector<8x128xf32> to vector<128xf32>
    %9 = vector.shape_cast %8 : vector<128xf32> to vector<1x128xf32>
    %10 = arith.addf %6, %9 : vector<1x128xf32>
    %c0_6 = arith.constant 0 : index
    %c0_7 = arith.constant 0 : index
    %11 = vector.load %arg4[%c0_6, %c0_7] : memref<1x128xf32, #tpu.memory_space<vmem>>, vector<1x128xf32>
    tpu.vector_store %arg4[%c0_6, %c0_7], %10 {strides = array<i32>} : memref<1x128xf32, #tpu.memory_space<vmem>>, vector<1x128xf32>,
    %c0_i32_8 = arith.constant 0 : i32
    %12 = arith.cmpi eq, %arg0, %c0_i32_8 : i32
    %13 = arith.extui %12 : i1 to i32
    %c0_i32_9 = arith.constant 0 : i32
    %14 = arith.cmpi ne, %13, %c0_i32_9 : i32
    scf.if %14 {
      %c0_10 = arith.constant 0 : index
      %c0_11 = arith.constant 0 : index
      %15 = vector.load %arg4[%c0_10, %c0_11] : memref<1x128xf32, #tpu.memory_space<vmem>>, vector<1x128xf32>
      %16 = vector.shape_cast %15 : vector<1x128xf32> to vector<1x1x128xf32>
      %cst_12 = arith.constant dense<0.000000e+00> : vector<1xf32>
      %17 = vector.multi_reduction <add>, %16, %cst_12 [1, 2] : vector<1x1x128xf32> to vector<1xf32>
      %18 = vector.shape_cast %17 : vector<1xf32> to vector<1x1x1xf32>
      %19 = vector.extract %18[0, 0, 0] : f32 from vector<1x1x1xf32>
      %cst_13 = arith.constant 6.250000e-02 : f32
      %20 = arith.mulf %19, %cst_13 : f32
      %c0_14 = arith.constant 0 : index
      %c0_15 = arith.constant 0 : index
      %21 = memref.load %arg3[%c0_14, %c0_15] : memref<1x1xf32, #tpu.memory_space<smem>>
      memref.store %20, %arg3[%c0_14, %c0_15] : memref<1x1xf32, #tpu.memory_space<smem>>
    } else {
    }
    return
  }
  func.func @transform_0(%arg0: i32) -> (i32, i32) {
    %c0_i32 = arith.constant 0 : i32
    %c0_i32_0 = arith.constant 0 : i32
    return %arg0, %c0_i32 : i32, i32
  }
  func.func @transform_1(%arg0: i32) -> (i32, i32) {
    %c0_i32 = arith.constant 0 : i32
    %c0_i32_0 = arith.constant 0 : i32
    return %arg0, %c0_i32 : i32, i32
  }
  func.func @transform_2(%arg0: i32) -> (i32, i32) {
    %c0_i32 = arith.constant 0 : i32
    %c0_i32_0 = arith.constant 0 : i32
    %c0_i32_1 = arith.constant 0 : i32
    return %c0_i32, %c0_i32_0 : i32, i32
  }
}

</mosaic_0001>

<llo_original>
// kernel: tpu_custom_call.1
$region0: #{tpu_custom_call.1}
  #allocation0 [shape = 'u32[]', space=smem, size = 0x4, offset = 0x4, fixed_abs, tag = 'smem constant byte address 0x4 - core index']
  #allocation1 [shape = 'u32[144,128]{1,0:T(1,128)}', space=vmem, size = 0x12000, scoped, tag = 'internal scratch']
  #allocation2 [shape = 'f32[1,128]{1,0:T(1,128)}', space=vmem, size = 0x200, scoped, tag = 'scratch operand']
  %s0 = inlined_call_operand.hbm [shape: f32[8,128], index: 0, kind: input, shape index: {}]
  %s1 = inlined_call_operand.hbm [shape: f32[8,128], index: 1, kind: input, shape index: {}]
  %s2 = inlined_call_operand.hbm [shape: f32[1,1], index: 2, kind: output, shape index: {}]
  %s3 = sld [smem:[#allocation0]]
  $region34: #{tpu_custom_call.1} parent=0
    _
  %s5 = ssub.s32 1, %s3
  %s6 = scalar_select 0, %s5, %s3
  $region1: #{tpu_custom_call.1} parent=0
    #allocation3 [shape = 'u8[4096]{0}', space=vmem, size = 0x1000, scoped, tag = 'input window, operand 0, single buffered']
    #allocation4 [shape = 's32[1]{0}', space=sflag, size = 0x4, scoped, tag = 'scoped memory for tpu_custom_call.1']
    #allocation5 [shape = 's32[1]{0}', space=sflag, size = 0x4, scoped, tag = 'scoped memory for tpu_custom_call.1']
    #allocation6 [shape = 'u8[4096]{0}', space=vmem, size = 0x1000, scoped, tag = 'input window, operand 1, single buffered']
    #allocation7 [shape = 's32[1]{0}', space=sflag, size = 0x4, scoped, tag = 'scoped memory for tpu_custom_call.1']
    #allocation8 [shape = 'u8[512]{0}', space=smem, size = 0x200, scoped, tag = 'output window, operand 0, single buffered']
    %7 = vsyncpa [#allocation4], 0
    %8 = vsyncpa [#allocation7], 0
    %9 = vsyncpa [#allocation5], 0
    // Predicated region
    $region2: #{tpu_custom_call.1} parent=1 // pred_check
      _
    $region3: #{tpu_custom_call.1} parent=1 // pred_check_branch
      %11 = sbr.rel (0) target = $region5
    $region4: #{tpu_custom_call.1} parent=1 // pred_region
      %s13 = ssub.s32 128, 128
      %14 = vsyncadd [#allocation4], %s13
      %s16 = sshll.u32 [#allocation3], 4
      %s17 = int_to_ptr.vmem [resolvable:$true] %s16
      %19 = dma.hbm_to_vmem [thread:$0]  %s0, 128, %s17, [#allocation4]
    $region5: #{tpu_custom_call.1} parent=1 // pred_fallthru
      _
    // Predicated region
    $region6: #{tpu_custom_call.1} parent=1 // pred_check
      _
    $region7: #{tpu_custom_call.1} parent=1 // pred_check_branch
      %21 = sbr.rel (0) target = $region9
    $region8: #{tpu_custom_call.1} parent=1 // pred_region
      %s23 = ssub.s32 128, 128
      %24 = vsyncadd [#allocation7], %s23
      %s26 = sshll.u32 [#allocation6], 4
      %s27 = int_to_ptr.vmem [resolvable:$true] %s26
      %29 = dma.hbm_to_vmem [thread:$0]  %s1, 128, %s27, [#allocation7]
    $region9: #{tpu_custom_call.1} parent=1 // pred_fallthru
      _
    // Predicated region
    $region10: #{tpu_custom_call.1} parent=1 // pred_check
      _
    $region11: #{tpu_custom_call.1} parent=1 // pred_check_branch
      %31 = sbr.rel (0) target = $region13
    $region12: #{tpu_custom_call.1} parent=1 // pred_region
      %32 = dma.done [#allocation4], 128
    $region13: #{tpu_custom_call.1} parent=1 // pred_fallthru
      _
    // Predicated region
    $region14: #{tpu_custom_call.1} parent=1 // pred_check
      _
    $region15: #{tpu_custom_call.1} parent=1 // pred_check_branch
      %34 = sbr.rel (0) target = $region17
    $region16: #{tpu_custom_call.1} parent=1 // pred_region
      %35 = dma.done [#allocation7], 128
    $region17: #{tpu_custom_call.1} parent=1 // pred_fallthru
      _
    %p36 = scmp.eq.s32.totalorder 0, 0
    // Predicated region
    $region18: #{tpu_custom_call.1} parent=1 // pred_check
      %p37 = pneg %p36
    $region19: #{tpu_custom_call.1} parent=1 // pred_check_branch
      %39 = sbr.rel (%p37) target = $region21
    $region20: #{tpu_custom_call.1} parent=1 // pred_region
      %40 = vst [vmem:[#allocation2] sm:$0x1] 0.0
    $region21: #{tpu_custom_call.1} parent=1 // pred_fallthru
      _
    %v41 = vld [vmem:[#allocation6] sm:$0xff]
    %v42 = vld [vmem:[#allocation3] sm:$0xff]
    %v43 = vsub.f32 %v41, %v42
    %v44 = vld [vmem:[#allocation2] sm:$0x1]
    %v45 = vmul.f32 %v43, %v43
    %v46 = vrot.slane %v45, 4
    %v47 = vadd.f32 %v45, %v46
    %v48 = vrot.slane %v47, 2
    %v49 = vadd.f32 %v47, %v48
    %v50 = vrot.slane %v49, 1
    %v51 = vadd.f32 %v49, %v50
    %v52 = vadd.f32 %v44, %v51
    %53 = vst [vmem:[#allocation2] sm:$0x1] %v52
    // Predicated region
    $region22: #{tpu_custom_call.1} parent=1 // pred_check
      %p54 = pneg %p36
    $region23: #{tpu_custom_call.1} parent=1 // pred_check_branch
      %56 = sbr.rel (%p54) target = $region25
    $region24: #{tpu_custom_call.1} parent=1 // pred_region
      %v57 = vld [vmem:[#allocation2] sm:$0x1]
      %vm58 = vcmask 1040384
      %v59 = vsel %vm58, %v57, 0.0
      %60 = vadd.xlane.f32.xlu0 %v59
      %v61 = vpop.xlane.xlu0 %60
      %v62 = vrot.slane %v61, 4
      %v63 = vadd.f32 %v61, %v62
      %v64 = vrot.slane %v63, 2
      %v65 = vadd.f32 %v63, %v64
      %v66 = vrot.slane %v65, 1
      %v67 = vadd.f32 %v65, %v66
      %s68 = vtos %v67
      %s69 = smul.f32 %s68, 0.0625
      %s70 = scalar_lea.smem [#allocation8], 0
      %71 = sst [smem:[%s70]] %s69
    $region25: #{tpu_custom_call.1} parent=1 // pred_fallthru
      _
    // Predicated region
    $region26: #{tpu_custom_call.1} parent=1 // pred_check
      _
    $region27: #{tpu_custom_call.1} parent=1 // pred_check_branch
      %73 = sbr.rel (0) target = $region29
    $region28: #{tpu_custom_call.1} parent=1 // pred_region
      %s75 = ssub.s32 16, 16
      %76 = vsyncadd [#allocation5], %s75
      %79 = dma.smem_to_hbm [#allocation8], 16, %s2, [#allocation5]
    $region29: #{tpu_custom_call.1} parent=1 // pred_fallthru
      _
    // Predicated region
    $region30: #{tpu_custom_call.1} parent=1 // pred_check
      _
    $region31: #{tpu_custom_call.1} parent=1 // pred_check_branch
      %81 = sbr.rel (0) target = $region33
    $region32: #{tpu_custom_call.1} parent=1 // pred_region
      %82 = dma.done [#allocation5], 16
    $region33: #{tpu_custom_call.1} parent=1 // pred_fallthru
      _
    %83 = sfence
    %84 = vsyncpa [#allocation4], 1
    %85 = vsyncpa [#allocation7], 1
    %86 = vsyncpa [#allocation5], 1

</llo_original>
